<compile_context>
chip_gen: v5e
topology: v5e:2x2
jax: 0.10.0
libtpu: 0.0.40
codegen_flags: <defaults>
</compile_context>

<pallas_src>
import jax
import jax.numpy as jnp
from jax import lax
from jax.experimental import pallas as pl
from jax.experimental.pallas import tpu as pltpu

# Fixed (non-trainable) Sobel weights from Sobelxy.__init__ (used by the
# pure-JAX reference; the kernel uses the separable decomposition).
_SOBEL_X = ((-1.0, 0.0, 1.0), (-2.0, 0.0, 2.0), (-1.0, 0.0, 1.0))
_SOBEL_Y = ((1.0, 2.0, 1.0), (0.0, 0.0, 0.0), (-1.0, -2.0, -1.0))


def _loss_kernel(a_ref, b_ref, f_ref, gt_ref, out_ref):
    nb, C, H, W = f_ref.shape

    # Elementwise math stays in bf16 when the inputs are bf16 (native VALU on
    # v6e/v7x, halves vreg/VMEM pressure); squares & sums are always f32.
    in_dt = jnp.dtype(f_ref.dtype)
    cdt = jnp.bfloat16 if in_dt == jnp.dtype(jnp.bfloat16) else jnp.float32

    # Boundary masks materialized ONCE as full (H, W) planes (JAX does not CSE
    # broadcast_in_dim, so per-use (H,1)/(1,W) operands re-emit broadcasts).
    row_ids = lax.broadcasted_iota(jnp.int32, (H, W), 0)
    col_ids = lax.broadcasted_iota(jnp.int32, (H, W), 1)
    not_last_row = (row_ids < H - 1).astype(cdt)
    not_first_row = (row_ids > 0).astype(cdt)
    not_last_col = (col_ids < W - 1).astype(cdt)
    not_first_col = (col_ids > 0).astype(cdt)

    # Circular +-1 shifts along H (sublanes) / W (lanes) via the XLU rotate.
    # pltpu.roll follows jnp.roll semantics; the wrapped row/col is zeroed by
    # the boundary masks above.
    def next_row(t):   # t[..., i+1, :]
        return pltpu.roll(t, H - 1, axis=t.ndim - 2)

    def prev_row(t):   # t[..., i-1, :]
        return pltpu.roll(t, 1, axis=t.ndim - 2)

    def next_col(t):   # t[..., j+1]
        return pltpu.roll(t, W - 1, axis=t.ndim - 1)

    def prev_col(t):   # t[..., j-1]
        return pltpu.roll(t, 1, axis=t.ndim - 1)

    def lane_sum(t):   # f32 sum over every axis except the last -> (W,)
        t = t.astype(jnp.float32)
        for _ in range(t.ndim - 1):
            t = jnp.sum(t, axis=0)
        return t

    # ---- L_Intensity and L_TV share x1 = fused - GT ------------------------
    # Upcast is fused into the subtract: no standalone f32 copies of f / gt.
    x1 = f_ref[...].astype(cdt) - gt_ref[...].astype(cdt)      # (nb, C, H, W)
    l1_vec = lane_sum(jnp.abs(x1))                             # (W,)

    # Replicate padding => diff is exactly zero at the last row / last col.
    d_row = ((x1 - next_row(x1)) * not_last_row).astype(jnp.float32)
    d_col = ((x1 - next_col(x1)) * not_last_col).astype(jnp.float32)
    tv_vec = lane_sum(d_row * d_row + d_col * d_col)           # (W,)

    # ---- L_Grad: separable Sobel ([1,2,1] smooth (x) [-1,0,1] diff), applied
    # per image (no (3*nb,H,W) concat) with zero-padding via the masks --------
    def sobel_mag(s):                                          # s: (nb, H, W)
        s2 = s + s
        vsm = prev_row(s) * not_first_row + s2 + next_row(s) * not_last_row
        hsm = prev_col(s) * not_first_col + s2 + next_col(s) * not_last_col
        gx = next_col(vsm) * not_last_col - prev_col(vsm) * not_first_col
        gy = prev_row(hsm) * not_first_row - next_row(hsm) * not_last_row
        return jnp.abs(gx) + jnp.abs(gy)

    g_joint = jnp.maximum(sobel_mag(a_ref[...].astype(cdt)),
                          sobel_mag(b_ref[...].astype(cdt)))   # max(|dA|, |dB|)
    g_fused = sobel_mag(f_ref[:, 0].astype(cdt))
    gr_vec = lane_sum(jnp.abs(g_fused - g_joint))              # (W,)

    # Three direct row writes into the (1, 3, W) output block; no stack relayout.
    out_ref[0, 0, :] = l1_vec
    out_ref[0, 1, :] = tv_vec
    out_ref[0, 2, :] = gr_vec


def _pick_batch_block(batch, channels, height, width, in_itemsize,
                      budget_bytes):
    """Largest divisor of `batch` whose per-grid-step footprint fits budget.

    Capped at batch // 2 (when batch >= 2) so the parallel batch axis always
    has >= 2 grid steps and both v7x TensorCores get work.
    """
    plane = height * width
    max_nb = batch // 2 if batch >= 2 else 1

    def step_bytes(nb):
        dma = 2 * nb * (2 * channels + 2) * plane * in_itemsize  # 2x buffered inputs
        live = nb * (5 * channels + 14) * plane * 4              # peak f32-ish temporaries
        masks = 4 * plane * 4
        out = 2 * 3 * width * 4
        return dma + live + masks + out

    best = 1
    for cand in range(1, max_nb + 1):
        if batch % cand == 0 and step_bytes(cand) <= budget_bytes:
            best = cand
    # TODO(synk): if even step_bytes(1) > budget (huge images on v7x), fall
    # back to an H-tiled grid with a 1-row halo instead of returning nb=1.
    return best


def fusion_loss_gt(image_A, image_B, image_fused, image_GT):
    B, C, H, W = image_fused.shape
    in_itemsize = jnp.dtype(image_fused.dtype).itemsize

    # Generation-aware VMEM sizing: budget ~ 3/8 and limit ~ 3/4 of physical
    # per-core VMEM (v5e/v6e: 48 / 96 MiB, v7x: 24 / 48 MiB).
    try:
        vmem_cap = int(pltpu.get_tpu_info().vmem_capacity_bytes)
    except Exception:
        vmem_cap = 64 * 1024 * 1024
    vmem_limit = (3 * vmem_cap) // 4
    budget = (3 * vmem_cap) // 8

    nb = _pick_batch_block(B, C, H, W, in_itemsize, budget)
    steps = B // nb

    # Y-channel inputs use a squeezed channel dim so the kernel sees (nb,H,W).
    y_spec = pl.BlockSpec((nb, None, H, W), lambda i: (i, 0, 0, 0))
    full_spec = pl.BlockSpec((nb, C, H, W), lambda i: (i, 0, 0, 0))
    out_spec = pl.BlockSpec((1, 3, W), lambda i: (i, 0, 0))

    rows = pl.pallas_call(
        _loss_kernel,
        out_shape=jax.ShapeDtypeStruct((steps, 3, W), jnp.float32),
        grid_spec=pltpu.PrefetchScalarGridSpec(
            num_scalar_prefetch=0,
            grid=(steps,),
            in_specs=[y_spec, y_spec, full_spec, full_spec],
            out_specs=out_spec,
        ),
        compiler_params=pltpu.CompilerParams(
            dimension_semantics=("parallel",),   # batch blocks are independent
            vmem_limit_bytes=vmem_limit,
        ),
    )(image_A, image_B, image_fused, image_GT)

    n_full = B * C * H * W   # elements for L1 / TV means
    n_y = B * H * W          # elements for gradient-loss mean (Y channel only)

    loss_l1 = 20.0 * jnp.sum(rows[:, 0, :]) / n_full
    loss_tv = 5.0 * jnp.sum(rows[:, 1, :]) / n_full
    loss_gradient = 10.0 * jnp.sum(rows[:, 2, :]) / n_y
    fusion_loss = loss_l1 + loss_tv + loss_gradient
    return fusion_loss, loss_tv, loss_gradient, loss_l1


def _ref_fusion_loss(image_A, image_B, image_fused, image_GT):
    """Pure-JAX reference mirroring the PyTorch module (correctness check)."""
    kx = jnp.array(_SOBEL_X, jnp.float32)[None, None]
    ky = jnp.array(_SOBEL_Y, jnp.float32)[None, None]

    def conv(x, k):
        return lax.conv_general_dilated(
            x, k, window_strides=(1, 1), padding=((1, 1), (1, 1)),
            dimension_numbers=("NCHW", "OIHW", "NCHW"))

    def sobel(x):
        return jnp.abs(conv(x, kx)) + jnp.abs(conv(x, ky))

    A_Y, B_Y, F_Y = (t[:, :1] for t in (image_A, image_B, image_fused))
    g_joint = jnp.maximum(sobel(A_Y), sobel(B_Y))
    loss_gradient = 10.0 * jnp.mean(jnp.abs(sobel(F_Y) - g_joint))
    loss_l1 = 20.0 * jnp.mean(jnp.abs(image_fused - image_GT))
    x1 = image_fused - image_GT
    temp1 = jnp.concatenate([x1[:, :, 1:, :], x1[:, :, -1:, :]], axis=2)
    temp2 = jnp.concatenate([x1[:, :, :, 1:], x1[:, :, :, -1:]], axis=3)
    loss_tv = 5.0 * jnp.mean((x1 - temp1) ** 2 + (x1 - temp2) ** 2)
    fusion_loss = loss_l1 + loss_tv + loss_gradient
    return fusion_loss, loss_tv, loss_gradient, loss_l1


if __name__ == "__main__":
    key = jax.random.PRNGKey(0)
    kA, kB, kF, kG = jax.random.split(key, 4)
    B, C, H, W = 2, 4, 16, 16
    image_A = jax.random.uniform(kA, (B, C, H, W), jnp.float32)
    image_B = jax.random.uniform(kB, (B, C, H, W), jnp.float32)
    image_fused = jax.random.uniform(kF, (B, C, H, W), jnp.float32)
    image_GT = jax.random.uniform(kG, (B, C, H, W), jnp.float32)

    out = fusion_loss_gt(image_A, image_B, image_fused, image_GT)
    out = jax.block_until_ready(out)

    ref = _ref_fusion_loss(image_A, image_B, image_fused, image_GT)
    for o, r in zip(out, ref):
        assert jnp.allclose(o, r, rtol=1e-4, atol=1e-5), (o, r)

    print("KERNEL_OK")
</pallas_src>

<mosaic_0001>
module attributes {stable_mosaic.version = 11 : i64} {
  func.func @_loss_kernel(%arg0: i32, %arg1: memref<1x1x16x16xf32, #tpu.memory_space<vmem>>, %arg2: memref<1x1x16x16xf32, #tpu.memory_space<vmem>>, %arg3: memref<1x4x16x16xf32, #tpu.memory_space<vmem>>, %arg4: memref<1x4x16x16xf32, #tpu.memory_space<vmem>>, %arg5: memref<1x3x16xf32, #tpu.memory_space<vmem>>) attributes {dimension_semantics = [#tpu.dimension_semantics<parallel>], iteration_bounds = array<i64: 2>, scalar_prefetch = 0 : i64, scratch_operands = 0 : i64, tpu.core_type = #tpu.core_type<tc>, window_params = [{transform_indices = @transform_0, window_bounds = array<i64: 1, 1, 16, 16>}, {transform_indices = @transform_1, window_bounds = array<i64: 1, 1, 16, 16>}, {transform_indices = @transform_2, window_bounds = array<i64: 1, 4, 16, 16>}, {transform_indices = @transform_3, window_bounds = array<i64: 1, 4, 16, 16>}, {transform_indices = @transform_4, window_bounds = array<i64: 1, 3, 16>}]} {
    %0 = tpu.iota {dimensions = array<i32: 0>} : vector<16x16xi32>
    %1 = tpu.iota {dimensions = array<i32: 1>} : vector<16x16xi32>
    %c15_i32 = arith.constant 15 : i32
    %2 = vector.broadcast %c15_i32 : i32 to vector<16x16xi32>
    %3 = arith.cmpi slt, %0, %2 : vector<16x16xi32>
    %4 = arith.extui %3 : vector<16x16xi1> to vector<16x16xi32>
    %5 = arith.sitofp %4 : vector<16x16xi32> to vector<16x16xf32>
    %c0_i32 = arith.constant 0 : i32
    %6 = vector.broadcast %c0_i32 : i32 to vector<16x16xi32>
    %7 = arith.cmpi sgt, %0, %6 : vector<16x16xi32>
    %8 = arith.extui %7 : vector<16x16xi1> to vector<16x16xi32>
    %9 = arith.sitofp %8 : vector<16x16xi32> to vector<16x16xf32>
    %c15_i32_0 = arith.constant 15 : i32
    %10 = vector.broadcast %c15_i32_0 : i32 to vector<16x16xi32>
    %11 = arith.cmpi slt, %1, %10 : vector<16x16xi32>
    %12 = arith.extui %11 : vector<16x16xi1> to vector<16x16xi32>
    %13 = arith.sitofp %12 : vector<16x16xi32> to vector<16x16xf32>
    %c0_i32_1 = arith.constant 0 : i32
    %14 = vector.broadcast %c0_i32_1 : i32 to vector<16x16xi32>
    %15 = arith.cmpi sgt, %1, %14 : vector<16x16xi32>
    %16 = arith.extui %15 : vector<16x16xi1> to vector<16x16xi32>
    %17 = arith.sitofp %16 : vector<16x16xi32> to vector<16x16xf32>
    %c0 = arith.constant 0 : index
    %c0_2 = arith.constant 0 : index
    %c0_3 = arith.constant 0 : index
    %c0_4 = arith.constant 0 : index
    %18 = vector.load %arg3[%c0, %c0_2, %c0_3, %c0_4] : memref<1x4x16x16xf32, #tpu.memory_space<vmem>>, vector<1x4x16x16xf32>
    %c0_5 = arith.constant 0 : index
    %c0_6 = arith.constant 0 : index
    %c0_7 = arith.constant 0 : index
    %c0_8 = arith.constant 0 : index
    %19 = vector.load %arg4[%c0_5, %c0_6, %c0_7, %c0_8] : memref<1x4x16x16xf32, #tpu.memory_space<vmem>>, vector<1x4x16x16xf32>
    %20 = arith.subf %18, %19 : vector<1x4x16x16xf32>
    %21 = math.absf %20 : vector<1x4x16x16xf32>
    %cst = arith.constant dense<0.000000e+00> : vector<4x16x16xf32>
    %22 = vector.multi_reduction <add>, %21, %cst [0] : vector<1x4x16x16xf32> to vector<4x16x16xf32>
    %cst_9 = arith.constant dense<0.000000e+00> : vector<16x16xf32>
    %23 = vector.multi_reduction <add>, %22, %cst_9 [0] : vector<4x16x16xf32> to vector<16x16xf32>
    %cst_10 = arith.constant dense<0.000000e+00> : vector<16xf32>
    %24 = vector.multi_reduction <add>, %23, %cst_10 [0] : vector<16x16xf32> to vector<16xf32>
    %c15_i32_11 = arith.constant 15 : i32
    %25 = tpu.dynamic_rotate %20 by %c15_i32_11 dim 2 : vector<1x4x16x16xf32>, i32 -> vector<1x4x16x16xf32>
    %26 = arith.subf %20, %25 : vector<1x4x16x16xf32>
    %27 = vector.shape_cast %5 : vector<16x16xf32> to vector<1x1x16x16xf32>
    %28 = vector.broadcast %27 : vector<1x1x16x16xf32> to vector<1x4x16x16xf32>
    %29 = arith.mulf %26, %28 : vector<1x4x16x16xf32>
    %c15_i32_12 = arith.constant 15 : i32
    %30 = tpu.dynamic_rotate %20 by %c15_i32_12 dim 3 : vector<1x4x16x16xf32>, i32 -> vector<1x4x16x16xf32>
    %31 = arith.subf %20, %30 : vector<1x4x16x16xf32>
    %32 = vector.shape_cast %13 : vector<16x16xf32> to vector<1x1x16x16xf32>
    %33 = vector.broadcast %32 : vector<1x1x16x16xf32> to vector<1x4x16x16xf32>
    %34 = arith.mulf %31, %33 : vector<1x4x16x16xf32>
    %35 = arith.mulf %29, %29 : vector<1x4x16x16xf32>
    %36 = arith.mulf %34, %34 : vector<1x4x16x16xf32>
    %37 = arith.addf %35, %36 : vector<1x4x16x16xf32>
    %cst_13 = arith.constant dense<0.000000e+00> : vector<4x16x16xf32>
    %38 = vector.multi_reduction <add>, %37, %cst_13 [0] : vector<1x4x16x16xf32> to vector<4x16x16xf32>
    %cst_14 = arith.constant dense<0.000000e+00> : vector<16x16xf32>
    %39 = vector.multi_reduction <add>, %38, %cst_14 [0] : vector<4x16x16xf32> to vector<16x16xf32>
    %cst_15 = arith.constant dense<0.000000e+00> : vector<16xf32>
    %40 = vector.multi_reduction <add>, %39, %cst_15 [0] : vector<16x16xf32> to vector<16xf32>
    %c0_16 = arith.constant 0 : index
    %c0_17 = arith.constant 0 : index
    %c0_18 = arith.constant 0 : index
    %c0_19 = arith.constant 0 : index
    %41 = vector.load %arg1[%c0_16, %c0_17, %c0_18, %c0_19] : memref<1x1x16x16xf32, #tpu.memory_space<vmem>>, vector<1x1x16x16xf32>
    %42 = vector.shape_cast %41 : vector<1x1x16x16xf32> to vector<1x16x16xf32>
    %43 = arith.addf %42, %42 : vector<1x16x16xf32>
    %c1_i32 = arith.constant 1 : i32
    %44 = tpu.dynamic_rotate %42 by %c1_i32 dim 1 : vector<1x16x16xf32>, i32 -> vector<1x16x16xf32>
    %45 = vector.shape_cast %9 : vector<16x16xf32> to vector<1x16x16xf32>
    %46 = arith.mulf %44, %45 : vector<1x16x16xf32>
    %47 = arith.addf %46, %43 : vector<1x16x16xf32>
    %c15_i32_20 = arith.constant 15 : i32
    %48 = tpu.dynamic_rotate %42 by %c15_i32_20 dim 1 : vector<1x16x16xf32>, i32 -> vector<1x16x16xf32>
    %49 = vector.shape_cast %5 : vector<16x16xf32> to vector<1x16x16xf32>
    %50 = arith.mulf %48, %49 : vector<1x16x16xf32>
    %51 = arith.addf %47, %50 : vector<1x16x16xf32>
    %c1_i32_21 = arith.constant 1 : i32
    %52 = tpu.dynamic_rotate %42 by %c1_i32_21 dim 2 : vector<1x16x16xf32>, i32 -> vector<1x16x16xf32>
    %53 = vector.shape_cast %17 : vector<16x16xf32> to vector<1x16x16xf32>
    %54 = arith.mulf %52, %53 : vector<1x16x16xf32>
    %55 = arith.addf %54, %43 : vector<1x16x16xf32>
    %c15_i32_22 = arith.constant 15 : i32
    %56 = tpu.dynamic_rotate %42 by %c15_i32_22 dim 2 : vector<1x16x16xf32>, i32 -> vector<1x16x16xf32>
    %57 = vector.shape_cast %13 : vector<16x16xf32> to vector<1x16x16xf32>
    %58 = arith.mulf %56, %57 : vector<1x16x16xf32>
    %59 = arith.addf %55, %58 : vector<1x16x16xf32>
    %c15_i32_23 = arith.constant 15 : i32
    %60 = tpu.dynamic_rotate %51 by %c15_i32_23 dim 2 : vector<1x16x16xf32>, i32 -> vector<1x16x16xf32>
    %61 = vector.shape_cast %13 : vector<16x16xf32> to vector<1x16x16xf32>
    %62 = arith.mulf %60, %61 : vector<1x16x16xf32>
    %c1_i32_24 = arith.constant 1 : i32
    %63 = tpu.dynamic_rotate %51 by %c1_i32_24 dim 2 : vector<1x16x16xf32>, i32 -> vector<1x16x16xf32>
    %64 = vector.shape_cast %17 : vector<16x16xf32> to vector<1x16x16xf32>
    %65 = arith.mulf %63, %64 : vector<1x16x16xf32>
    %66 = arith.subf %62, %65 : vector<1x16x16xf32>
    %c1_i32_25 = arith.constant 1 : i32
    %67 = tpu.dynamic_rotate %59 by %c1_i32_25 dim 1 : vector<1x16x16xf32>, i32 -> vector<1x16x16xf32>
    %68 = vector.shape_cast %9 : vector<16x16xf32> to vector<1x16x16xf32>
    %69 = arith.mulf %67, %68 : vector<1x16x16xf32>
    %c15_i32_26 = arith.constant 15 : i32
    %70 = tpu.dynamic_rotate %59 by %c15_i32_26 dim 1 : vector<1x16x16xf32>, i32 -> vector<1x16x16xf32>
    %71 = vector.shape_cast %5 : vector<16x16xf32> to vector<1x16x16xf32>
    %72 = arith.mulf %70, %71 : vector<1x16x16xf32>
    %73 = arith.subf %69, %72 : vector<1x16x16xf32>
    %74 = math.absf %66 : vector<1x16x16xf32>
    %75 = math.absf %73 : vector<1x16x16xf32>
    %76 = arith.addf %74, %75 : vector<1x16x16xf32>
    %c0_27 = arith.constant 0 : index
    %c0_28 = arith.constant 0 : index
    %c0_29 = arith.constant 0 : index
    %c0_30 = arith.constant 0 : index
    %77 = vector.load %arg2[%c0_27, %c0_28, %c0_29, %c0_30] : memref<1x1x16x16xf32, #tpu.memory_space<vmem>>, vector<1x1x16x16xf32>
    %78 = vector.shape_cast %77 : vector<1x1x16x16xf32> to vector<1x16x16xf32>
    %79 = arith.addf %78, %78 : vector<1x16x16xf32>
    %c1_i32_31 = arith.constant 1 : i32
    %80 = tpu.dynamic_rotate %78 by %c1_i32_31 dim 1 : vector<1x16x16xf32>, i32 -> vector<1x16x16xf32>
    %81 = vector.shape_cast %9 : vector<16x16xf32> to vector<1x16x16xf32>
    %82 = arith.mulf %80, %81 : vector<1x16x16xf32>
    %83 = arith.addf %82, %79 : vector<1x16x16xf32>
    %c15_i32_32 = arith.constant 15 : i32
    %84 = tpu.dynamic_rotate %78 by %c15_i32_32 dim 1 : vector<1x16x16xf32>, i32 -> vector<1x16x16xf32>
    %85 = vector.shape_cast %5 : vector<16x16xf32> to vector<1x16x16xf32>
    %86 = arith.mulf %84, %85 : vector<1x16x16xf32>
    %87 = arith.addf %83, %86 : vector<1x16x16xf32>
    %c1_i32_33 = arith.constant 1 : i32
    %88 = tpu.dynamic_rotate %78 by %c1_i32_33 dim 2 : vector<1x16x16xf32>, i32 -> vector<1x16x16xf32>
    %89 = vector.shape_cast %17 : vector<16x16xf32> to vector<1x16x16xf32>
    %90 = arith.mulf %88, %89 : vector<1x16x16xf32>
    %91 = arith.addf %90, %79 : vector<1x16x16xf32>
    %c15_i32_34 = arith.constant 15 : i32
    %92 = tpu.dynamic_rotate %78 by %c15_i32_34 dim 2 : vector<1x16x16xf32>, i32 -> vector<1x16x16xf32>
    %93 = vector.shape_cast %13 : vector<16x16xf32> to vector<1x16x16xf32>
    %94 = arith.mulf %92, %93 : vector<1x16x16xf32>
    %95 = arith.addf %91, %94 : vector<1x16x16xf32>
    %c15_i32_35 = arith.constant 15 : i32
    %96 = tpu.dynamic_rotate %87 by %c15_i32_35 dim 2 : vector<1x16x16xf32>, i32 -> vector<1x16x16xf32>
    %97 = vector.shape_cast %13 : vector<16x16xf32> to vector<1x16x16xf32>
    %98 = arith.mulf %96, %97 : vector<1x16x16xf32>
    %c1_i32_36 = arith.constant 1 : i32
    %99 = tpu.dynamic_rotate %87 by %c1_i32_36 dim 2 : vector<1x16x16xf32>, i32 -> vector<1x16x16xf32>
    %100 = vector.shape_cast %17 : vector<16x16xf32> to vector<1x16x16xf32>
    %101 = arith.mulf %99, %100 : vector<1x16x16xf32>
    %102 = arith.subf %98, %101 : vector<1x16x16xf32>
    %c1_i32_37 = arith.constant 1 : i32
    %103 = tpu.dynamic_rotate %95 by %c1_i32_37 dim 1 : vector<1x16x16xf32>, i32 -> vector<1x16x16xf32>
    %104 = vector.shape_cast %9 : vector<16x16xf32> to vector<1x16x16xf32>
    %105 = arith.mulf %103, %104 : vector<1x16x16xf32>
    %c15_i32_38 = arith.constant 15 : i32
    %106 = tpu.dynamic_rotate %95 by %c15_i32_38 dim 1 : vector<1x16x16xf32>, i32 -> vector<1x16x16xf32>
    %107 = vector.shape_cast %5 : vector<16x16xf32> to vector<1x16x16xf32>
    %108 = arith.mulf %106, %107 : vector<1x16x16xf32>
    %109 = arith.subf %105, %108 : vector<1x16x16xf32>
    %110 = math.absf %102 : vector<1x16x16xf32>
    %111 = math.absf %109 : vector<1x16x16xf32>
    %112 = arith.addf %110, %111 : vector<1x16x16xf32>
    %113 = arith.maximumf %76, %112 : vector<1x16x16xf32>
    %c0_39 = arith.constant 0 : index
    %c0_40 = arith.constant 0 : index
    %c0_41 = arith.constant 0 : index
    %c0_42 = arith.constant 0 : index
    %114 = vector.load %arg3[%c0_39, %c0_40, %c0_41, %c0_42] : memref<1x4x16x16xf32, #tpu.memory_space<vmem>>, vector<1x1x16x16xf32>
    %115 = vector.shape_cast %114 : vector<1x1x16x16xf32> to vector<1x16x16xf32>
    %116 = arith.addf %115, %115 : vector<1x16x16xf32>
    %c1_i32_43 = arith.constant 1 : i32
    %117 = tpu.dynamic_rotate %115 by %c1_i32_43 dim 1 : vector<1x16x16xf32>, i32 -> vector<1x16x16xf32>
    %118 = vector.shape_cast %9 : vector<16x16xf32> to vector<1x16x16xf32>
    %119 = arith.mulf %117, %118 : vector<1x16x16xf32>
    %120 = arith.addf %119, %116 : vector<1x16x16xf32>
    %c15_i32_44 = arith.constant 15 : i32
    %121 = tpu.dynamic_rotate %115 by %c15_i32_44 dim 1 : vector<1x16x16xf32>, i32 -> vector<1x16x16xf32>
    %122 = vector.shape_cast %5 : vector<16x16xf32> to vector<1x16x16xf32>
    %123 = arith.mulf %121, %122 : vector<1x16x16xf32>
    %124 = arith.addf %120, %123 : vector<1x16x16xf32>
    %c1_i32_45 = arith.constant 1 : i32
    %125 = tpu.dynamic_rotate %115 by %c1_i32_45 dim 2 : vector<1x16x16xf32>, i32 -> vector<1x16x16xf32>
    %126 = vector.shape_cast %17 : vector<16x16xf32> to vector<1x16x16xf32>
    %127 = arith.mulf %125, %126 : vector<1x16x16xf32>
    %128 = arith.addf %127, %116 : vector<1x16x16xf32>
    %c15_i32_46 = arith.constant 15 : i32
    %129 = tpu.dynamic_rotate %115 by %c15_i32_46 dim 2 : vector<1x16x16xf32>, i32 -> vector<1x16x16xf32>
    %130 = vector.shape_cast %13 : vector<16x16xf32> to vector<1x16x16xf32>
    %131 = arith.mulf %129, %130 : vector<1x16x16xf32>
    %132 = arith.addf %128, %131 : vector<1x16x16xf32>
    %c15_i32_47 = arith.constant 15 : i32
    %133 = tpu.dynamic_rotate %124 by %c15_i32_47 dim 2 : vector<1x16x16xf32>, i32 -> vector<1x16x16xf32>
    %134 = vector.shape_cast %13 : vector<16x16xf32> to vector<1x16x16xf32>
    %135 = arith.mulf %133, %134 : vector<1x16x16xf32>
    %c1_i32_48 = arith.constant 1 : i32
    %136 = tpu.dynamic_rotate %124 by %c1_i32_48 dim 2 : vector<1x16x16xf32>, i32 -> vector<1x16x16xf32>
    %137 = vector.shape_cast %17 : vector<16x16xf32> to vector<1x16x16xf32>
    %138 = arith.mulf %136, %137 : vector<1x16x16xf32>
    %139 = arith.subf %135, %138 : vector<1x16x16xf32>
    %c1_i32_49 = arith.constant 1 : i32
    %140 = tpu.dynamic_rotate %132 by %c1_i32_49 dim 1 : vector<1x16x16xf32>, i32 -> vector<1x16x16xf32>
    %141 = vector.shape_cast %9 : vector<16x16xf32> to vector<1x16x16xf32>
    %142 = arith.mulf %140, %141 : vector<1x16x16xf32>
    %c15_i32_50 = arith.constant 15 : i32
    %143 = tpu.dynamic_rotate %132 by %c15_i32_50 dim 1 : vector<1x16x16xf32>, i32 -> vector<1x16x16xf32>
    %144 = vector.shape_cast %5 : vector<16x16xf32> to vector<1x16x16xf32>
    %145 = arith.mulf %143, %144 : vector<1x16x16xf32>
    %146 = arith.subf %142, %145 : vector<1x16x16xf32>
    %147 = math.absf %139 : vector<1x16x16xf32>
    %148 = math.absf %146 : vector<1x16x16xf32>
    %149 = arith.addf %147, %148 : vector<1x16x16xf32>
    %150 = arith.subf %149, %113 : vector<1x16x16xf32>
    %151 = math.absf %150 : vector<1x16x16xf32>
    %cst_51 = arith.constant dense<0.000000e+00> : vector<16x16xf32>
    %152 = vector.multi_reduction <add>, %151, %cst_51 [0] : vector<1x16x16xf32> to vector<16x16xf32>
    %cst_52 = arith.constant dense<0.000000e+00> : vector<16xf32>
    %153 = vector.multi_reduction <add>, %152, %cst_52 [0] : vector<16x16xf32> to vector<16xf32>
    %c0_53 = arith.constant 0 : index
    %c0_54 = arith.constant 0 : index
    %c0_55 = arith.constant 0 : index
    %154 = vector.load %arg5[%c0_53, %c0_54, %c0_55] : memref<1x3x16xf32, #tpu.memory_space<vmem>>, vector<1x1x16xf32>
    %155 = vector.shape_cast %154 : vector<1x1x16xf32> to vector<16xf32>
    %156 = vector.shape_cast %24 : vector<16xf32> to vector<1x1x16xf32>
    tpu.vector_store %arg5[%c0_53, %c0_54, %c0_55], %156 {strides = array<i32>} : memref<1x3x16xf32, #tpu.memory_space<vmem>>, vector<1x1x16xf32>,
    %c0_56 = arith.constant 0 : index
    %c1 = arith.constant 1 : index
    %c0_57 = arith.constant 0 : index
    %157 = vector.load %arg5[%c0_56, %c1, %c0_57] : memref<1x3x16xf32, #tpu.memory_space<vmem>>, vector<1x1x16xf32>
    %158 = vector.shape_cast %157 : vector<1x1x16xf32> to vector<16xf32>
    %159 = vector.shape_cast %40 : vector<16xf32> to vector<1x1x16xf32>
    tpu.vector_store %arg5[%c0_56, %c1, %c0_57], %159 {strides = array<i32>} : memref<1x3x16xf32, #tpu.memory_space<vmem>>, vector<1x1x16xf32>,
    %c0_58 = arith.constant 0 : index
    %c2 = arith.constant 2 : index
    %c0_59 = arith.constant 0 : index
    %160 = vector.load %arg5[%c0_58, %c2, %c0_59] : memref<1x3x16xf32, #tpu.memory_space<vmem>>, vector<1x1x16xf32>
    %161 = vector.shape_cast %160 : vector<1x1x16xf32> to vector<16xf32>
    %162 = vector.shape_cast %153 : vector<16xf32> to vector<1x1x16xf32>
    tpu.vector_store %arg5[%c0_58, %c2, %c0_59], %162 {strides = array<i32>} : memref<1x3x16xf32, #tpu.memory_space<vmem>>, vector<1x1x16xf32>,
    return
  }
  func.func @transform_0(%arg0: i32) -> (i32, i32, i32, i32) {
    %c0_i32 = arith.constant 0 : i32
    %c0_i32_0 = arith.constant 0 : i32
    %c0_i32_1 = arith.constant 0 : i32
    %c0_i32_2 = arith.constant 0 : i32
    return %arg0, %c0_i32, %c0_i32_0, %c0_i32_1 : i32, i32, i32, i32
  }
  func.func @transform_1(%arg0: i32) -> (i32, i32, i32, i32) {
    %c0_i32 = arith.constant 0 : i32
    %c0_i32_0 = arith.constant 0 : i32
    %c0_i32_1 = arith.constant 0 : i32
    %c0_i32_2 = arith.constant 0 : i32
    return %arg0, %c0_i32, %c0_i32_0, %c0_i32_1 : i32, i32, i32, i32
  }
  func.func @transform_2(%arg0: i32) -> (i32, i32, i32, i32) {
    %c0_i32 = arith.constant 0 : i32
    %c0_i32_0 = arith.constant 0 : i32
    %c0_i32_1 = arith.constant 0 : i32
    %c0_i32_2 = arith.constant 0 : i32
    return %arg0, %c0_i32, %c0_i32_0, %c0_i32_1 : i32, i32, i32, i32
  }
  func.func @transform_3(%arg0: i32) -> (i32, i32, i32, i32) {
    %c0_i32 = arith.constant 0 : i32
    %c0_i32_0 = arith.constant 0 : i32
    %c0_i32_1 = arith.constant 0 : i32
    %c0_i32_2 = arith.constant 0 : i32
    return %arg0, %c0_i32, %c0_i32_0, %c0_i32_1 : i32, i32, i32, i32
  }
  func.func @transform_4(%arg0: i32) -> (i32, i32, i32) {
    %c0_i32 = arith.constant 0 : i32
    %c0_i32_0 = arith.constant 0 : i32
    %c0_i32_1 = arith.constant 0 : i32
    return %arg0, %c0_i32, %c0_i32_0 : i32, i32, i32
  }
}

</mosaic_0001>

<llo_original>
// kernel: tpu_custom_call.1
$region0: #{tpu_custom_call.1}
  #allocation0 [shape = 'u32[]', space=smem, size = 0x4, offset = 0x4, fixed_abs, tag = 'smem constant byte address 0x4 - core index']
  #allocation1 [shape = 'u32[72,128]{1,0:T(1,128)}', space=vmem, size = 0x9000, scoped, tag = 'internal scratch']
  %s0 = inlined_call_operand.hbm [shape: f32[2,4,16,16], index: 0, kind: input, shape index: {}]
  %s1 = inlined_call_operand.hbm [shape: f32[2,4,16,16], index: 1, kind: input, shape index: {}]
  %s2 = inlined_call_operand.hbm [shape: f32[2,4,16,16], index: 2, kind: input, shape index: {}]
  %s3 = inlined_call_operand.hbm [shape: f32[2,4,16,16], index: 3, kind: input, shape index: {}]
  %s4 = inlined_call_operand.vmem [shape: f32[2,3,16], index: 4, kind: output, shape index: {}]
  %s5 = sld [smem:[#allocation0]]
  $region65: #{tpu_custom_call.1} parent=0
    _
  %s7 = ssub.s32 1, %s5
  %s8 = scalar_select 0, %s7, %s5
  $region1: #{tpu_custom_call.1} parent=0
    #allocation2 [shape = 'u8[16384]{0}', space=vmem, size = 0x4000, scoped, tag = 'input window, operand 0']
    #allocation3 [shape = 's32[2]{0}', space=sflag, size = 0x8, scoped, tag = 'scoped memory for tpu_custom_call.1']
    #allocation4 [shape = 'u8[16384]{0}', space=vmem, size = 0x4000, scoped, tag = 'input window, operand 1']
    #allocation5 [shape = 's32[2]{0}', space=sflag, size = 0x8, scoped, tag = 'scoped memory for tpu_custom_call.1']
    #allocation6 [shape = 'u8[65536]{0}', space=vmem, size = 0x10000, scoped, tag = 'input window, operand 2']
    #allocation7 [shape = 'u8[65536]{0}', space=vmem, size = 0x10000, scoped, tag = 'input window, operand 3']
    #allocation8 [shape = 's32[2]{0}', space=sflag, size = 0x8, scoped, tag = 'scoped memory for tpu_custom_call.1']
    %9 = vsyncpa [#allocation3], 0
    %s10 = scalar_lea.sflag [#allocation3], 1
    %11 = vsyncpa %s10, 0
    %12 = vsyncpa [#allocation5], 0
    %s13 = scalar_lea.sflag [#allocation5], 1
    %14 = vsyncpa %s13, 0
    %15 = vsyncpa [#allocation8], 0
    %s16 = scalar_lea.sflag [#allocation8], 1
    %17 = vsyncpa %s16, 0
    loop: start=0, step=1, limit=4
    $region2: #{tpu_custom_call.1} parent=1 // loop_pre_header
      _
    $region3: #{tpu_custom_call.1} parent=1 // loop_header
      %s19 = sphi 0, %s23
      %p20 = scmp.ge.s32.totalorder %s19, 4
      %s29 = sphi 0, %s31
      %s32 = sphi 0, %s29
      %s33 = sphi 0, %s32
      %s49 = sphi 0, %s33
      %s55 = sphi 0, %s57
      %s58 = sphi 0, %s55
      %s59 = sphi 0, %s58
      %s75 = sphi 0, %s59
      %s81 = sphi 0, %s83
      %s84 = sphi 0, %s81
      %s85 = sphi 0, %s84
      %s101 = sphi 0, %s85
      %s107 = sphi 0, %s109
      %s110 = sphi 0, %s107
      %s111 = sphi 0, %s110
      %s127 = sphi 0, %s111
      %s133 = sphi 0, %s135
      %s136 = sphi 0, %s133
      %s137 = sphi 0, %s136
      %s153 = sphi 0, %s137
    $region4: #{tpu_custom_call.1} parent=1 // loop_header_branch
      %22 = sbr.rel (%p20) target = $region8
    $region5: #{tpu_custom_call.1} parent=1 // loop_body
      %s24 = ssub.s32 %s19, 1
      %s25 = ssub.s32 %s19, 2
      %s26 = sadd.s32 %s19, 1
      %s27 = ssub.s32 %s19, %s26
      %p28 = scmp.eq.s32.totalorder %s27, 0
      %s30 = sadd.s32 %s29, 1
      %s31 = scalar_select %p28, %s29, %s30
      %p34 = pneg %p28
      %p35 = scmp.eq.s32.totalorder %s19, 1
      %p36 = por %p34, %p35
      %p37 = scmp.ne.s32.totalorder %s29, %s32
      %p38 = scmp.eq.s32.totalorder %s19, 0
      %p39 = por %p37, %p38
      %p40 = scmp.ne.s32.totalorder %s29, %s32
      %p41 = scmp.eq.s32.totalorder %s24, 1
      %p42 = por %p40, %p41
      %p43 = scmp.ne.s32.totalorder %s32, %s33
      %p44 = scmp.eq.s32.totalorder %s24, 0
      %p45 = por %p43, %p44
      %p46 = scmp.ne.s32.totalorder %s32, %s33
      %p47 = scmp.eq.s32.totalorder %s25, 1
      %p48 = por %p46, %p47
      %p50 = scmp.ne.s32.totalorder %s33, %s49
      %p51 = scmp.eq.s32.totalorder %s25, 0
      %p52 = por %p50, %p51
      %s53 = ssub.s32 %s19, %s26
      %p54 = scmp.eq.s32.totalorder %s53, 0
      %s56 = sadd.s32 %s55, 1
      %s57 = scalar_select %p54, %s55, %s56
      %p60 = pneg %p54
      %p61 = scmp.eq.s32.totalorder %s19, 1
      %p62 = por %p60, %p61
      %p63 = scmp.ne.s32.totalorder %s55, %s58
      %p64 = scmp.eq.s32.totalorder %s19, 0
      %p65 = por %p63, %p64
      %p66 = scmp.ne.s32.totalorder %s55, %s58
      %p67 = scmp.eq.s32.totalorder %s24, 1
      %p68 = por %p66, %p67
      %p69 = scmp.ne.s32.totalorder %s58, %s59
      %p70 = scmp.eq.s32.totalorder %s24, 0
      %p71 = por %p69, %p70
      %p72 = scmp.ne.s32.totalorder %s58, %s59
      %p73 = scmp.eq.s32.totalorder %s25, 1
      %p74 = por %p72, %p73
      %p76 = scmp.ne.s32.totalorder %s59, %s75
      %p77 = scmp.eq.s32.totalorder %s25, 0
      %p78 = por %p76, %p77
      %s79 = ssub.s32 %s19, %s26
      %p80 = scmp.eq.s32.totalorder %s79, 0
      %s82 = sadd.s32 %s81, 1
      %s83 = scalar_select %p80, %s81, %s82
      %p86 = pneg %p80
      %p87 = scmp.eq.s32.totalorder %s19, 1
      %p88 = por %p86, %p87
      %p89 = scmp.ne.s32.totalorder %s81, %s84
      %p90 = scmp.eq.s32.totalorder %s19, 0
      %p91 = por %p89, %p90
      %p92 = scmp.ne.s32.totalorder %s81, %s84
      %p93 = scmp.eq.s32.totalorder %s24, 1
      %p94 = por %p92, %p93
      %p95 = scmp.ne.s32.totalorder %s84, %s85
      %p96 = scmp.eq.s32.totalorder %s24, 0
      %p97 = por %p95, %p96
      %p98 = scmp.ne.s32.totalorder %s84, %s85
      %p99 = scmp.eq.s32.totalorder %s25, 1
      %p100 = por %p98, %p99
      %p102 = scmp.ne.s32.totalorder %s85, %s101
      %p103 = scmp.eq.s32.totalorder %s25, 0
      %p104 = por %p102, %p103
      %s105 = ssub.s32 %s19, %s26
      %p106 = scmp.eq.s32.totalorder %s105, 0
      %s108 = sadd.s32 %s107, 1
      %s109 = scalar_select %p106, %s107, %s108
      %p112 = pneg %p106
      %p113 = scmp.eq.s32.totalorder %s19, 1
      %p114 = por %p112, %p113
      %p115 = scmp.ne.s32.totalorder %s107, %s110
      %p116 = scmp.eq.s32.totalorder %s19, 0
      %p117 = por %p115, %p116
      %p118 = scmp.ne.s32.totalorder %s107, %s110
      %p119 = scmp.eq.s32.totalorder %s24, 1
      %p120 = por %p118, %p119
      %p121 = scmp.ne.s32.totalorder %s110, %s111
      %p122 = scmp.eq.s32.totalorder %s24, 0
      %p123 = por %p121, %p122
      %p124 = scmp.ne.s32.totalorder %s110, %s111
      %p125 = scmp.eq.s32.totalorder %s25, 1
      %p126 = por %p124, %p125
      %p128 = scmp.ne.s32.totalorder %s111, %s127
      %p129 = scmp.eq.s32.totalorder %s25, 0
      %p130 = por %p128, %p129
      %s131 = ssub.s32 %s19, %s26
      %p132 = scmp.eq.s32.totalorder %s131, 0
      %s134 = sadd.s32 %s133, 1
      %s135 = scalar_select %p132, %s133, %s134
      %p138 = pneg %p132
      %p139 = scmp.eq.s32.totalorder %s19, 1
      %p140 = por %p138, %p139
      %p141 = scmp.ne.s32.totalorder %s133, %s136
      %p142 = scmp.eq.s32.totalorder %s19, 0
      %p143 = por %p141, %p142
      %p144 = scmp.ne.s32.totalorder %s133, %s136
      %p145 = scmp.eq.s32.totalorder %s24, 1
      %p146 = por %p144, %p145
      %p147 = scmp.ne.s32.totalorder %s136, %s137
      %p148 = scmp.eq.s32.totalorder %s24, 0
      %p149 = por %p147, %p148
      %p150 = scmp.ne.s32.totalorder %s136, %s137
      %p151 = scmp.eq.s32.totalorder %s25, 1
      %p152 = por %p150, %p151
      %p154 = scmp.ne.s32.totalorder %s137, %s153
      %p155 = scmp.eq.s32.totalorder %s25, 0
      %p156 = por %p154, %p155
      %p157 = scmp.le.s32.totalorder 1, %s19
      %p158 = scmp.lt.s32.totalorder %s19, 3
      %p159 = pnand %p157, %p158
      %p160 = pneg %p159
      // Predicated region
      $region9: #{tpu_custom_call.1} parent=5 // pred_check
        _
      $region10: #{tpu_custom_call.1} parent=5 // pred_check_branch
        %162 = sbr.rel (%p159) target = $region12
      $region11: #{tpu_custom_call.1} parent=5 // pred_region
        %s163 = ssub.s32 %s19, 1
      $region12: #{tpu_custom_call.1} parent=5 // pred_fallthru
        _
      %p164 = scmp.lt.s32.totalorder %s19, 2
      // Predicated region
      $region13: #{tpu_custom_call.1} parent=5 // pred_check
        %p165 = pneg %p164
      $region14: #{tpu_custom_call.1} parent=5 // pred_check_branch
        %167 = sbr.rel (%p165) target = $region16
      $region15: #{tpu_custom_call.1} parent=5 // pred_region
        // Predicated region
        $region17: #{tpu_custom_call.1} parent=15 // pred_check
          %p168 = pneg %p39
        $region18: #{tpu_custom_call.1} parent=15 // pred_check_branch
          %170 = sbr.rel (%p168) target = $region20
        $region19: #{tpu_custom_call.1} parent=15 // pred_region
          %s171 = sand.u32 %s29, 1
          %s172 = scalar_lea.sflag [#allocation3], %s171
          %s173 = sand.u32 %s29, 1
          %s174 = smul.addr %s173, 16
          %s175 = scalar_lea.vmem [#allocation2], %s174
          %177 = vsyncadd %s172, 0
          %s178 = smul.addr %s19, 8
          %s179 = smul.addr %s178, 8
          %s180 = scalar_lea.hbm %s0, %s179
          %s181 = sshll.u32 %s180, 4
          %s182 = int_to_ptr.hbm [resolvable:$true] %s181
          %s183 = sshll.u32 %s175, 4
          %s184 = int_to_ptr.vmem [resolvable:$true] %s183
          %189 = dma.hbm_to_vmem [thread:$0]  %s182, 256, %s184, %s172, 128, 128, 8
        $region20: #{tpu_custom_call.1} parent=15 // pred_fallthru
          _
        // Predicated region
        $region21: #{tpu_custom_call.1} parent=15 // pred_check
          %p190 = pneg %p65
        $region22: #{tpu_custom_call.1} parent=15 // pred_check_branch
          %192 = sbr.rel (%p190) target = $region24
        $region23: #{tpu_custom_call.1} parent=15 // pred_region
          %s193 = sand.u32 %s19, 1
          %s194 = scalar_lea.sflag [#allocation5], %s193
          %s195 = sand.u32 %s55, 1
          %s196 = smul.addr %s195, 16
          %s197 = scalar_lea.vmem [#allocation4], %s196
          %199 = vsyncadd %s194, 0
          %s200 = smul.addr %s19, 8
          %s201 = smul.addr %s200, 8
          %s202 = scalar_lea.hbm %s1, %s201
          %s203 = sshll.u32 %s202, 4
          %s204 = int_to_ptr.hbm [resolvable:$true] %s203
          %s205 = sshll.u32 %s197, 4
          %s206 = int_to_ptr.vmem [resolvable:$true] %s205
          %211 = dma.hbm_to_vmem [thread:$0]  %s204, 256, %s206, %s194, 128, 128, 8
        $region24: #{tpu_custom_call.1} parent=15 // pred_fallthru
          _
        // Predicated region
        $region25: #{tpu_custom_call.1} parent=15 // pred_check
          %p212 = pneg %p91
        $region26: #{tpu_custom_call.1} parent=15 // pred_check_branch
          %214 = sbr.rel (%p212) target = $region28
        $region27: #{tpu_custom_call.1} parent=15 // pred_region
          %s215 = sand.u32 %s19, 1
          %s216 = scalar_lea.sflag [#allocation5], %s215
          %s217 = sand.u32 %s81, 1
          %s218 = smul.addr %s217, 64
          %s219 = scalar_lea.vmem [#allocation6], %s218
          %221 = vsyncadd %s216, 0
          %s222 = smul.addr %s19, 8
          %s223 = smul.addr %s222, 8
          %s224 = scalar_lea.hbm %s2, %s223
          %s225 = sshll.u32 %s224, 4
          %s226 = int_to_ptr.hbm [resolvable:$true] %s225
          %s227 = sshll.u32 %s219, 4
          %s228 = int_to_ptr.vmem [resolvable:$true] %s227
          %233 = dma.hbm_to_vmem [thread:$0]  %s226, 1024, %s228, %s216, 128, 128, 8
        $region28: #{tpu_custom_call.1} parent=15 // pred_fallthru
          _
        // Predicated region
        $region29: #{tpu_custom_call.1} parent=15 // pred_check
          %p234 = pneg %p117
        $region30: #{tpu_custom_call.1} parent=15 // pred_check_branch
          %236 = sbr.rel (%p234) target = $region32
        $region31: #{tpu_custom_call.1} parent=15 // pred_region
          %s237 = sand.u32 %s107, 1
          %s238 = scalar_lea.sflag [#allocation8], %s237
          %s239 = sand.u32 %s107, 1
          %s240 = smul.addr %s239, 64
          %s241 = scalar_lea.vmem [#allocation7], %s240
          %243 = vsyncadd %s238, 0
          %s244 = smul.addr %s19, 8
          %s245 = smul.addr %s244, 8
          %s246 = scalar_lea.hbm %s3, %s245
          %s247 = sshll.u32 %s246, 4
          %s248 = int_to_ptr.hbm [resolvable:$true] %s247
          %s249 = sshll.u32 %s241, 4
          %s250 = int_to_ptr.vmem [resolvable:$true] %s249
          %255 = dma.hbm_to_vmem [thread:$0]  %s248, 1024, %s250, %s238, 128, 128, 8
        $region32: #{tpu_custom_call.1} parent=15 // pred_fallthru
          _
      $region16: #{tpu_custom_call.1} parent=5 // pred_fallthru
        _
      %p256 = scmp.le.s32.totalorder 1, %s19
      %p257 = scmp.lt.s32.totalorder %s19, 3
      %p258 = pnand %p256, %p257
      %p259 = pneg %p258
      // Predicated region
      $region33: #{tpu_custom_call.1} parent=5 // pred_check
        _
      $region34: #{tpu_custom_call.1} parent=5 // pred_check_branch
        %261 = sbr.rel (%p258) target = $region36
      $region35: #{tpu_custom_call.1} parent=5 // pred_region
        %s262 = ssub.s32 %s19, 1
        %s263 = sand.u32 %s32, 1
        %s264 = scalar_lea.sflag [#allocation3], %s263
        %s265 = sand.u32 %s32, 1
        %s266 = smul.addr %s265, 16
        %s267 = scalar_lea.vmem [#allocation2], %s266
        // Predicated region
        $region37: #{tpu_custom_call.1} parent=35 // pred_check
          %p268 = pneg %p45
        $region38: #{tpu_custom_call.1} parent=35 // pred_check_branch
          %270 = sbr.rel (%p268) target = $region40
        $region39: #{tpu_custom_call.1} parent=35 // pred_region
          %272 = dma.done %s264, 256
        $region40: #{tpu_custom_call.1} parent=35 // pred_fallthru
          _
        %s273 = sand.u32 %s24, 1
        %s274 = scalar_lea.sflag [#allocation5], %s273
        %s275 = sand.u32 %s58, 1
        %s276 = smul.addr %s275, 16
        %s277 = scalar_lea.vmem [#allocation4], %s276
        // Predicated region
        $region41: #{tpu_custom_call.1} parent=35 // pred_check
          %p278 = pneg %p71
        $region42: #{tpu_custom_call.1} parent=35 // pred_check_branch
          %280 = sbr.rel (%p278) target = $region44
        $region43: #{tpu_custom_call.1} parent=35 // pred_region
          %282 = dma.done %s274, 256
        $region44: #{tpu_custom_call.1} parent=35 // pred_fallthru
          _
        %s283 = sand.u32 %s24, 1
        %s284 = scalar_lea.sflag [#allocation5], %s283
        %s285 = sand.u32 %s84, 1
        %s286 = smul.addr %s285, 64
        %s287 = scalar_lea.vmem [#allocation6], %s286
        // Predicated region
        $region45: #{tpu_custom_call.1} parent=35 // pred_check
          %p288 = pneg %p97
        $region46: #{tpu_custom_call.1} parent=35 // pred_check_branch
          %290 = sbr.rel (%p288) target = $region48
        $region47: #{tpu_custom_call.1} parent=35 // pred_region
          %292 = dma.done %s284, 1024
        $region48: #{tpu_custom_call.1} parent=35 // pred_fallthru
          _
        %s293 = sand.u32 %s110, 1
        %s294 = scalar_lea.sflag [#allocation8], %s293
        %s295 = sand.u32 %s110, 1
        %s296 = smul.addr %s295, 64
        %s297 = scalar_lea.vmem [#allocation7], %s296
        // Predicated region
        $region49: #{tpu_custom_call.1} parent=35 // pred_check
          %p298 = pneg %p123
        $region50: #{tpu_custom_call.1} parent=35 // pred_check_branch
          %300 = sbr.rel (%p298) target = $region52
        $region51: #{tpu_custom_call.1} parent=35 // pred_region
          %302 = dma.done %s294, 1024
        $region52: #{tpu_custom_call.1} parent=35 // pred_fallthru
          _
        %s303 = sand.u32 %s32, 1
        %s304 = scalar_lea.sflag [#allocation3], %s303
        %s305 = sand.u32 %s32, 1
        %s306 = smul.addr %s305, 16
        %s307 = scalar_lea.vmem [#allocation2], %s306
        %p308 = pneg %p45
        %p309 = pneg %p42
        %s310 = sand.u32 %s24, 1
        %s311 = scalar_lea.sflag [#allocation5], %s310
        %s312 = sand.u32 %s58, 1
        %s313 = smul.addr %s312, 16
        %s314 = scalar_lea.vmem [#allocation4], %s313
        %p315 = pneg %p71
        %p316 = pneg %p68
        %s317 = sand.u32 %s24, 1
        %s318 = scalar_lea.sflag [#allocation5], %s317
        %s319 = sand.u32 %s84, 1
        %s320 = smul.addr %s319, 64
        %s321 = scalar_lea.vmem [#allocation6], %s320
        %p322 = pneg %p97
        %p323 = pneg %p94
        %s324 = sand.u32 %s110, 1
        %s325 = scalar_lea.sflag [#allocation8], %s324
        %s326 = sand.u32 %s110, 1
        %s327 = smul.addr %s326, 64
        %s328 = scalar_lea.vmem [#allocation7], %s327
        %p329 = pneg %p123
        %p330 = pneg %p120
        %p331 = pneg %p149
        %p332 = pneg %p146
        %p333 = scmp.lt.s32.totalorder %s24, 1
        %s334 = scalar_select %p333, %s24, 1
        %s335 = smul.addr %s334, 4
        %s336 = scalar_lea.vmem %s4, %s335
        %p337 = scmp.lt.s32.totalorder %s24, 1
        %s338 = scalar_select %p337, %s24, 1
        %s339 = smul.addr %s338, 4
        %s340 = scalar_lea.vmem %s4, %s339
        %v341 = vlaneseq
        %v342 = vshrl.u32 %v341, 7
        %v343 = vadd.s32 %v342, 8
        %v344 = vlaneseq
        %v345 = vand.u32 %v344, 127
        %vm346 = vcmp.lt.s32.totalorder %v342, 15
        %vm347 = vcmp.lt.s32.totalorder %v343, 15
        %v348 = vsel %vm346, 1, 0
        %v349 = vsel %vm347, 1, 0
        %v350 = vcvt.s32.f32 %v348
        %v351 = vcvt.s32.f32 %v349
        %vm352 = vcmp.gt.s32.totalorder %v342, 0
        %vm353 = vcmp.gt.s32.totalorder %v343, 0
        %v354 = vsel %vm352, 1, 0
        %v355 = vsel %vm353, 1, 0
        %v356 = vcvt.s32.f32 %v354
        %v357 = vcvt.s32.f32 %v355
        %vm358 = vcmp.lt.s32.totalorder %v345, 15
        %v359 = vsel %vm358, 1, 0
        %v360 = vcvt.s32.f32 %v359
        %vm361 = vcmp.gt.s32.totalorder %v345, 0
        %v362 = vsel %vm361, 1, 0
        %v363 = vcvt.s32.f32 %v362
        %v364 = vld [vmem:[%s287] sm:$0xff]
        %v365 = vld [vmem:[%s287 + $0x8] sm:$0xff]
        %v366 = vld [vmem:[%s287 + $0x10] sm:$0xff]
        %v367 = vld [vmem:[%s287 + $0x18] sm:$0xff]
        %v368 = vld [vmem:[%s287 + $0x20] sm:$0xff]
        %v369 = vld [vmem:[%s287 + $0x28] sm:$0xff]
        %v370 = vld [vmem:[%s287 + $0x30] sm:$0xff]
        %v371 = vld [vmem:[%s287 + $0x38] sm:$0xff]
        %v372 = vld [vmem:[%s297] sm:$0xff]
        %v373 = vld [vmem:[%s297 + $0x8] sm:$0xff]
        %v374 = vld [vmem:[%s297 + $0x10] sm:$0xff]
        %v375 = vld [vmem:[%s297 + $0x18] sm:$0xff]
        %v376 = vld [vmem:[%s297 + $0x20] sm:$0xff]
        %v377 = vld [vmem:[%s297 + $0x28] sm:$0xff]
        %v378 = vld [vmem:[%s297 + $0x30] sm:$0xff]
        %v379 = vld [vmem:[%s297 + $0x38] sm:$0xff]
        %v380 = vsub.f32 %v364, %v372
        %v381 = vsub.f32 %v365, %v373
        %v382 = vsub.f32 %v366, %v374
        %v383 = vsub.f32 %v367, %v375
        %v384 = vsub.f32 %v368, %v376
        %v385 = vsub.f32 %v369, %v377
        %v386 = vsub.f32 %v370, %v378
        %v387 = vsub.f32 %v371, %v379
        %v388 = vand.u32 2147483647, %v380
        %v389 = vand.u32 2147483647, %v381
        %v390 = vand.u32 2147483647, %v382
        %v391 = vand.u32 2147483647, %v383
        %v392 = vand.u32 2147483647, %v384
        %v393 = vand.u32 2147483647, %v385
        %v394 = vand.u32 2147483647, %v386
        %v395 = vand.u32 2147483647, %v387
        %v396 = vadd.f32 %v388, 0.0
        %v397 = vadd.f32 %v389, 0.0
        %v398 = vadd.f32 %v390, 0.0
        %v399 = vadd.f32 %v391, 0.0
        %v400 = vadd.f32 %v392, 0.0
        %v401 = vadd.f32 %v393, 0.0
        %v402 = vadd.f32 %v394, 0.0
        %v403 = vadd.f32 %v395, 0.0
        %vm404 = vcmask 130048
        %v405 = vsel %vm404, %v396, 0.0
        %v406 = vsel %vm404, %v398, 0.0
        %v407 = vadd.f32 %v405, %v406
        %v408 = vsel %vm404, %v400, 0.0
        %v409 = vadd.f32 %v407, %v408
        %v410 = vsel %vm404, %v402, 0.0
        %v411 = vadd.f32 %v409, %v410
        %v412 = vsel %vm404, %v397, 0.0
        %v413 = vsel %vm404, %v399, 0.0
        %v414 = vadd.f32 %v412, %v413
        %v415 = vsel %vm404, %v401, 0.0
        %v416 = vadd.f32 %v414, %v415
        %v417 = vsel %vm404, %v403, 0.0
        %v418 = vadd.f32 %v416, %v417
        %v419 = vsel %vm404, %v411, 0.0
        %v420 = vsel %vm404, %v418, 0.0
        %v421 = vadd.f32 %v419, %v420
        %v422 = vrot.slane %v421, 4
        %v423 = vadd.f32 %v421, %v422
        %v424 = vrot.slane %v423, 2
        %v425 = vadd.f32 %v423, %v424
        %v426 = vrot.slane %v425, 1
        %v427 = vadd.f32 %v425, %v426
        %v428 = vrot.slane %v380, 1
        %v429 = vrot.slane %v382, 1
        %v430 = vrot.slane %v384, 1
        %v431 = vrot.slane %v386, 1
        %v432 = vrot.slane %v381, 1
        %v433 = vrot.slane %v383, 1
        %v434 = vrot.slane %v385, 1
        %v435 = vrot.slane %v387, 1
        %vm436 = vcmp.lt.s32.totalorder %v342, 7
        %v437 = vsel %vm436, %v428, %v432
        %v438 = vsel %vm436, %v429, %v433
        %v439 = vsel %vm436, %v430, %v434
        %v440 = vsel %vm436, %v431, %v435
        %v441 = vsel %vm436, %v432, %v428
        %v442 = vsel %vm436, %v433, %v429
        %v443 = vsel %vm436, %v434, %v430
        %v444 = vsel %vm436, %v435, %v431
        %v445 = vsub.f32 %v380, %v437
        %v446 = vsub.f32 %v381, %v441
        %v447 = vsub.f32 %v382, %v438
        %v448 = vsub.f32 %v383, %v442
        %v449 = vsub.f32 %v384, %v439
        %v450 = vsub.f32 %v385, %v443
        %v451 = vsub.f32 %v386, %v440
        %v452 = vsub.f32 %v387, %v444
        %v453 = vmul.f32 %v445, %v350
        %v454 = vmul.f32 %v446, %v351
        %v455 = vmul.f32 %v447, %v350
        %v456 = vmul.f32 %v448, %v351
        %v457 = vmul.f32 %v449, %v350
        %v458 = vmul.f32 %v450, %v351
        %v459 = vmul.f32 %v451, %v350
        %v460 = vmul.f32 %v452, %v351
        %vm461 = vcmask 1047680
        %462 = vrot.lane.b32.xlu0 %v380, 16
        %v463 = vpop.permute.xlu0 %462
        %v464 = vsel %vm461, %v463, %v380
        %465 = vrot.lane.b32.xlu0 %v381, 16
        %v466 = vpop.permute.xlu0 %465
        %v467 = vsel %vm461, %v466, %v381
        %468 = vrot.lane.b32.xlu0 %v382, 16
        %v469 = vpop.permute.xlu0 %468
        %v470 = vsel %vm461, %v469, %v382
        %471 = vrot.lane.b32.xlu0 %v383, 16
        %v472 = vpop.permute.xlu0 %471
        %v473 = vsel %vm461, %v472, %v383
        %474 = vrot.lane.b32.xlu0 %v384, 16
        %v475 = vpop.permute.xlu0 %474
        %v476 = vsel %vm461, %v475, %v384
        %477 = vrot.lane.b32.xlu0 %v385, 16
        %v478 = vpop.permute.xlu0 %477
        %v479 = vsel %vm461, %v478, %v385
        %480 = vrot.lane.b32.xlu0 %v386, 16
        %v481 = vpop.permute.xlu0 %480
        %v482 = vsel %vm461, %v481, %v386
        %483 = vrot.lane.b32.xlu0 %v387, 16
        %v484 = vpop.permute.xlu0 %483
        %v485 = vsel %vm461, %v484, %v387
        %486 = vrot.lane.b32.xlu0 %v464, 16
        %v487 = vpop.permute.xlu0 %486
        %488 = vrot.lane.b32.xlu0 %v467, 16
        %v489 = vpop.permute.xlu0 %488
        %490 = vrot.lane.b32.xlu0 %v470, 16
        %v491 = vpop.permute.xlu0 %490
        %492 = vrot.lane.b32.xlu0 %v473, 16
        %v493 = vpop.permute.xlu0 %492
        %494 = vrot.lane.b32.xlu0 %v476, 16
        %v495 = vpop.permute.xlu0 %494
        %496 = vrot.lane.b32.xlu0 %v479, 16
        %v497 = vpop.permute.xlu0 %496
        %498 = vrot.lane.b32.xlu0 %v482, 16
        %v499 = vpop.permute.xlu0 %498
        %500 = vrot.lane.b32.xlu0 %v485, 16
        %v501 = vpop.permute.xlu0 %500
        %v502 = vsel %vm461, %v487, %v380
        %v503 = vsel %vm461, %v489, %v381
        %v504 = vsel %vm461, %v491, %v382
        %v505 = vsel %vm461, %v493, %v383
        %v506 = vsel %vm461, %v495, %v384
        %v507 = vsel %vm461, %v497, %v385
        %v508 = vsel %vm461, %v499, %v386
        %v509 = vsel %vm461, %v501, %v387
        %518 = vrot.lane.b32.xlu0 %v502, 127
        %v519 = vpop.permute.xlu0 %518
        %520 = vrot.lane.b32.xlu0 %v503, 127
        %v521 = vpop.permute.xlu0 %520
        %522 = vrot.lane.b32.xlu0 %v504, 127
        %v523 = vpop.permute.xlu0 %522
        %524 = vrot.lane.b32.xlu0 %v505, 127
        %v525 = vpop.permute.xlu0 %524
        %526 = vrot.lane.b32.xlu0 %v506, 127
        %v527 = vpop.permute.xlu0 %526
        %528 = vrot.lane.b32.xlu0 %v507, 127
        %v529 = vpop.permute.xlu0 %528
        %530 = vrot.lane.b32.xlu0 %v508, 127
        %v531 = vpop.permute.xlu0 %530
        %532 = vrot.lane.b32.xlu0 %v509, 127
        %v533 = vpop.permute.xlu0 %532
        %v542 = vsub.f32 %v380, %v519
        %v543 = vsub.f32 %v381, %v521
        %v544 = vsub.f32 %v382, %v523
        %v545 = vsub.f32 %v383, %v525
        %v546 = vsub.f32 %v384, %v527
        %v547 = vsub.f32 %v385, %v529
        %v548 = vsub.f32 %v386, %v531
        %v549 = vsub.f32 %v387, %v533
        %v550 = vmul.f32 %v542, %v360
        %v551 = vmul.f32 %v543, %v360
        %v552 = vmul.f32 %v544, %v360
        %v553 = vmul.f32 %v545, %v360
        %v554 = vmul.f32 %v546, %v360
        %v555 = vmul.f32 %v547, %v360
        %v556 = vmul.f32 %v548, %v360
        %v557 = vmul.f32 %v549, %v360
        %v558 = vmul.f32 %v453, %v453
        %v559 = vmul.f32 %v454, %v454
        %v560 = vmul.f32 %v455, %v455
        %v561 = vmul.f32 %v456, %v456
        %v562 = vmul.f32 %v457, %v457
        %v563 = vmul.f32 %v458, %v458
        %v564 = vmul.f32 %v459, %v459
        %v565 = vmul.f32 %v460, %v460
        %v566 = vmul.f32 %v550, %v550
        %v567 = vmul.f32 %v551, %v551
        %v568 = vmul.f32 %v552, %v552
        %v569 = vmul.f32 %v553, %v553
        %v570 = vmul.f32 %v554, %v554
        %v571 = vmul.f32 %v555, %v555
        %v572 = vmul.f32 %v556, %v556
        %v573 = vmul.f32 %v557, %v557
        %v574 = vadd.f32 %v558, %v566
        %v575 = vadd.f32 %v559, %v567
        %v576 = vadd.f32 %v560, %v568
        %v577 = vadd.f32 %v561, %v569
        %v578 = vadd.f32 %v562, %v570
        %v579 = vadd.f32 %v563, %v571
        %v580 = vadd.f32 %v564, %v572
        %v581 = vadd.f32 %v565, %v573
        %v582 = vadd.f32 %v574, 0.0
        %v583 = vadd.f32 %v575, 0.0
        %v584 = vadd.f32 %v576, 0.0
        %v585 = vadd.f32 %v577, 0.0
        %v586 = vadd.f32 %v578, 0.0
        %v587 = vadd.f32 %v579, 0.0
        %v588 = vadd.f32 %v580, 0.0
        %v589 = vadd.f32 %v581, 0.0
        %v590 = vsel %vm404, %v582, 0.0
        %v591 = vsel %vm404, %v584, 0.0
        %v592 = vadd.f32 %v590, %v591
        %v593 = vsel %vm404, %v586, 0.0
        %v594 = vadd.f32 %v592, %v593
        %v595 = vsel %vm404, %v588, 0.0
        %v596 = vadd.f32 %v594, %v595
        %v597 = vsel %vm404, %v583, 0.0
        %v598 = vsel %vm404, %v585, 0.0
        %v599 = vadd.f32 %v597, %v598
        %v600 = vsel %vm404, %v587, 0.0
        %v601 = vadd.f32 %v599, %v600
        %v602 = vsel %vm404, %v589, 0.0
        %v603 = vadd.f32 %v601, %v602
        %v604 = vsel %vm404, %v596, 0.0
        %v605 = vsel %vm404, %v603, 0.0
        %v606 = vadd.f32 %v604, %v605
        %v607 = vrot.slane %v606, 4
        %v608 = vadd.f32 %v606, %v607
        %v609 = vrot.slane %v608, 2
        %v610 = vadd.f32 %v608, %v609
        %v611 = vrot.slane %v610, 1
        %v612 = vadd.f32 %v610, %v611
        %v613 = vld [vmem:[%s267] sm:$0xff]
        %v614 = vld [vmem:[%s267 + $0x8] sm:$0xff]
        %v615 = vadd.f32 %v613, %v613
        %v616 = vadd.f32 %v614, %v614
        %v617 = vrot.slane %v613, 7
        %v618 = vrot.slane %v614, 7
        %vm619 = vcmp.lt.s32.totalorder %v342, 1
        %v620 = vsel %vm619, %v617, %v618
        %v621 = vsel %vm619, %v618, %v617
        %v622 = vmul.f32 %v621, %v356
        %v623 = vmul.f32 %v620, %v357
        %v624 = vadd.f32 %v622, %v615
        %v625 = vadd.f32 %v623, %v616
        %v626 = vrot.slane %v613, 1
        %v627 = vrot.slane %v614, 1
        %v628 = vsel %vm436, %v626, %v627
        %v629 = vsel %vm436, %v627, %v626
        %v630 = vmul.f32 %v628, %v350
        %v631 = vmul.f32 %v629, %v351
        %v632 = vadd.f32 %v624, %v630
        %v633 = vadd.f32 %v625, %v631
        %634 = vrot.lane.b32.xlu0 %v613, 16
        %v635 = vpop.permute.xlu0 %634
        %v636 = vsel %vm461, %v635, %v613
        %637 = vrot.lane.b32.xlu0 %v614, 16
        %v638 = vpop.permute.xlu0 %637
        %v639 = vsel %vm461, %v638, %v614
        %640 = vrot.lane.b32.xlu0 %v636, 16
        %v641 = vpop.permute.xlu0 %640
        %642 = vrot.lane.b32.xlu0 %v639, 16
        %v643 = vpop.permute.xlu0 %642
        %v644 = vsel %vm461, %v641, %v613
        %v645 = vsel %vm461, %v643, %v614
        %647 = vrot.lane.b32.xlu0 %v363, 15
        %v648 = vpop.permute.xlu0 %647
        %v650 = vmul.f32 %v644, %v648
        %v651 = vmul.f32 %v645, %v648
        %654 = vrot.lane.b32.xlu0 %v615, 15
        %v655 = vpop.permute.xlu0 %654
        %656 = vrot.lane.b32.xlu0 %v616, 15
        %v657 = vpop.permute.xlu0 %656
        %v660 = vadd.f32 %v650, %v655
        %v661 = vadd.f32 %v651, %v657
        %663 = vrot.lane.b32.xlu0 %v360, 1
        %v664 = vpop.permute.xlu0 %663
        %v666 = vmul.f32 %v644, %v664
        %v667 = vmul.f32 %v645, %v664
        %670 = vrot.lane.b32.xlu0 %v666, 14
        %v671 = vpop.permute.xlu0 %670
        %672 = vrot.lane.b32.xlu0 %v667, 14
        %v673 = vpop.permute.xlu0 %672
        %v676 = vadd.f32 %v660, %v671
        %v677 = vadd.f32 %v661, %v673
        %678 = vrot.lane.b32.xlu0 %v632, 16
        %v679 = vpop.permute.xlu0 %678
        %v680 = vsel %vm461, %v679, %v632
        %681 = vrot.lane.b32.xlu0 %v633, 16
        %v682 = vpop.permute.xlu0 %681
        %v683 = vsel %vm461, %v682, %v633
        %684 = vrot.lane.b32.xlu0 %v680, 16
        %v685 = vpop.permute.xlu0 %684
        %686 = vrot.lane.b32.xlu0 %v683, 16
        %v687 = vpop.permute.xlu0 %686
        %v688 = vsel %vm461, %v685, %v632
        %v689 = vsel %vm461, %v687, %v633
        %v690 = vmul.f32 %v688, %v664
        %v691 = vmul.f32 %v689, %v664
        %v692 = vmul.f32 %v688, %v648
        %v693 = vmul.f32 %v689, %v648
        %696 = vrot.lane.b32.xlu0 %v692, 114
        %v697 = vpop.permute.xlu0 %696
        %698 = vrot.lane.b32.xlu0 %v693, 114
        %v699 = vpop.permute.xlu0 %698
        %v702 = vsub.f32 %v690, %v697
        %v703 = vsub.f32 %v691, %v699
        %706 = vrot.lane.b32.xlu0 %v676, 113
        %v707 = vpop.permute.xlu0 %706
        %708 = vrot.lane.b32.xlu0 %v677, 113
        %v709 = vpop.permute.xlu0 %708
        %v712 = vrot.slane %v707, 7
        %v713 = vrot.slane %v709, 7
        %v714 = vsel %vm619, %v712, %v713
        %v715 = vsel %vm619, %v713, %v712
        %v716 = vmul.f32 %v715, %v356
        %v717 = vmul.f32 %v714, %v357
        %v718 = vrot.slane %v707, 1
        %v719 = vrot.slane %v709, 1
        %v720 = vsel %vm436, %v718, %v719
        %v721 = vsel %vm436, %v719, %v718
        %v722 = vmul.f32 %v720, %v350
        %v723 = vmul.f32 %v721, %v351
        %v724 = vsub.f32 %v716, %v722
        %v725 = vsub.f32 %v717, %v723
        %v726 = vand.u32 2147483647, %v702
        %v727 = vand.u32 2147483647, %v703
        %v728 = vand.u32 2147483647, %v724
        %v729 = vand.u32 2147483647, %v725
        %732 = vrot.lane.b32.xlu0 %v728, 1
        %v733 = vpop.permute.xlu0 %732
        %734 = vrot.lane.b32.xlu0 %v729, 1
        %v735 = vpop.permute.xlu0 %734
        %v738 = vadd.f32 %v726, %v733
        %v739 = vadd.f32 %v727, %v735
        %v740 = vld [vmem:[%s277] sm:$0xff]
        %v741 = vld [vmem:[%s277 + $0x8] sm:$0xff]
        %v742 = vadd.f32 %v740, %v740
        %v743 = vadd.f32 %v741, %v741
        %v744 = vrot.slane %v740, 7
        %v745 = vrot.slane %v741, 7
        %v746 = vsel %vm619, %v744, %v745
        %v747 = vsel %vm619, %v745, %v744
        %v748 = vmul.f32 %v747, %v356
        %v749 = vmul.f32 %v746, %v357
        %v750 = vadd.f32 %v748, %v742
        %v751 = vadd.f32 %v749, %v743
        %v752 = vrot.slane %v740, 1
        %v753 = vrot.slane %v741, 1
        %v754 = vsel %vm436, %v752, %v753
        %v755 = vsel %vm436, %v753, %v752
        %v756 = vmul.f32 %v754, %v350
        %v757 = vmul.f32 %v755, %v351
        %v758 = vadd.f32 %v750, %v756
        %v759 = vadd.f32 %v751, %v757
        %760 = vrot.lane.b32.xlu0 %v740, 16
        %v761 = vpop.permute.xlu0 %760
        %v762 = vsel %vm461, %v761, %v740
        %763 = vrot.lane.b32.xlu0 %v741, 16
        %v764 = vpop.permute.xlu0 %763
        %v765 = vsel %vm461, %v764, %v741
        %766 = vrot.lane.b32.xlu0 %v762, 16
        %v767 = vpop.permute.xlu0 %766
        %768 = vrot.lane.b32.xlu0 %v765, 16
        %v769 = vpop.permute.xlu0 %768
        %v770 = vsel %vm461, %v767, %v740
        %v771 = vsel %vm461, %v769, %v741
        %v772 = vmul.f32 %v770, %v648
        %v773 = vmul.f32 %v771, %v648
        %776 = vrot.lane.b32.xlu0 %v742, 15
        %v777 = vpop.permute.xlu0 %776
        %778 = vrot.lane.b32.xlu0 %v743, 15
        %v779 = vpop.permute.xlu0 %778
        %v782 = vadd.f32 %v772, %v777
        %v783 = vadd.f32 %v773, %v779
        %v784 = vmul.f32 %v770, %v664
        %v785 = vmul.f32 %v771, %v664
        %788 = vrot.lane.b32.xlu0 %v784, 14
        %v789 = vpop.permute.xlu0 %788
        %790 = vrot.lane.b32.xlu0 %v785, 14
        %v791 = vpop.permute.xlu0 %790
        %v794 = vadd.f32 %v782, %v789
        %v795 = vadd.f32 %v783, %v791
        %796 = vrot.lane.b32.xlu0 %v758, 16
        %v797 = vpop.permute.xlu0 %796
        %v798 = vsel %vm461, %v797, %v758
        %799 = vrot.lane.b32.xlu0 %v759, 16
        %v800 = vpop.permute.xlu0 %799
        %v801 = vsel %vm461, %v800, %v759
        %802 = vrot.lane.b32.xlu0 %v798, 16
        %v803 = vpop.permute.xlu0 %802
        %804 = vrot.lane.b32.xlu0 %v801, 16
        %v805 = vpop.permute.xlu0 %804
        %v806 = vsel %vm461, %v803, %v758
        %v807 = vsel %vm461, %v805, %v759
        %v808 = vmul.f32 %v806, %v664
        %v809 = vmul.f32 %v807, %v664
        %v810 = vmul.f32 %v806, %v648
        %v811 = vmul.f32 %v807, %v648
        %814 = vrot.lane.b32.xlu0 %v810, 114
        %v815 = vpop.permute.xlu0 %814
        %816 = vrot.lane.b32.xlu0 %v811, 114
        %v817 = vpop.permute.xlu0 %816
        %v820 = vsub.f32 %v808, %v815
        %v821 = vsub.f32 %v809, %v817
        %824 = vrot.lane.b32.xlu0 %v794, 113
        %v825 = vpop.permute.xlu0 %824
        %826 = vrot.lane.b32.xlu0 %v795, 113
        %v827 = vpop.permute.xlu0 %826
        %v830 = vrot.slane %v825, 7
        %v831 = vrot.slane %v827, 7
        %v832 = vsel %vm619, %v830, %v831
        %v833 = vsel %vm619, %v831, %v830
        %v834 = vmul.f32 %v833, %v356
        %v835 = vmul.f32 %v832, %v357
        %v836 = vrot.slane %v825, 1
        %v837 = vrot.slane %v827, 1
        %v838 = vsel %vm436, %v836, %v837
        %v839 = vsel %vm436, %v837, %v836
        %v840 = vmul.f32 %v838, %v350
        %v841 = vmul.f32 %v839, %v351
        %v842 = vsub.f32 %v834, %v840
        %v843 = vsub.f32 %v835, %v841
        %v844 = vand.u32 2147483647, %v820
        %v845 = vand.u32 2147483647, %v821
        %v846 = vand.u32 2147483647, %v842
        %v847 = vand.u32 2147483647, %v843
        %850 = vrot.lane.b32.xlu0 %v846, 1
        %v851 = vpop.permute.xlu0 %850
        %852 = vrot.lane.b32.xlu0 %v847, 1
        %v853 = vpop.permute.xlu0 %852
        %v856 = vadd.f32 %v844, %v851
        %v857 = vadd.f32 %v845, %v853
        %v858 = vmax.f32 %v738, %v856
        %v859 = vmax.f32 %v739, %v857
        %v860 = vadd.f32 %v364, %v364
        %v861 = vadd.f32 %v365, %v365
        %v862 = vrot.slane %v364, 7
        %v863 = vrot.slane %v365, 7
        %v864 = vsel %vm619, %v862, %v863
        %v865 = vsel %vm619, %v863, %v862
        %v866 = vmul.f32 %v865, %v356
        %v867 = vmul.f32 %v864, %v357
        %v868 = vadd.f32 %v866, %v860
        %v869 = vadd.f32 %v867, %v861
        %v870 = vrot.slane %v364, 1
        %v871 = vrot.slane %v365, 1
        %v872 = vsel %vm436, %v870, %v871
        %v873 = vsel %vm436, %v871, %v870
        %v874 = vmul.f32 %v872, %v350
        %v875 = vmul.f32 %v873, %v351
        %v876 = vadd.f32 %v868, %v874
        %v877 = vadd.f32 %v869, %v875
        %878 = vrot.lane.b32.xlu0 %v364, 16
        %v879 = vpop.permute.xlu0 %878
        %v880 = vsel %vm461, %v879, %v364
        %881 = vrot.lane.b32.xlu0 %v365, 16
        %v882 = vpop.permute.xlu0 %881
        %v883 = vsel %vm461, %v882, %v365
        %884 = vrot.lane.b32.xlu0 %v880, 16
        %v885 = vpop.permute.xlu0 %884
        %886 = vrot.lane.b32.xlu0 %v883, 16
        %v887 = vpop.permute.xlu0 %886
        %v888 = vsel %vm461, %v885, %v364
        %v889 = vsel %vm461, %v887, %v365
        %v890 = vmul.f32 %v888, %v648
        %v891 = vmul.f32 %v889, %v648
        %894 = vrot.lane.b32.xlu0 %v860, 15
        %v895 = vpop.permute.xlu0 %894
        %896 = vrot.lane.b32.xlu0 %v861, 15
        %v897 = vpop.permute.xlu0 %896
        %v900 = vadd.f32 %v890, %v895
        %v901 = vadd.f32 %v891, %v897
        %v902 = vmul.f32 %v888, %v664
        %v903 = vmul.f32 %v889, %v664
        %906 = vrot.lane.b32.xlu0 %v902, 14
        %v907 = vpop.permute.xlu0 %906
        %908 = vrot.lane.b32.xlu0 %v903, 14
        %v909 = vpop.permute.xlu0 %908
        %v912 = vadd.f32 %v900, %v907
        %v913 = vadd.f32 %v901, %v909
        %914 = vrot.lane.b32.xlu0 %v876, 16
        %v915 = vpop.permute.xlu0 %914
        %v916 = vsel %vm461, %v915, %v876
        %917 = vrot.lane.b32.xlu0 %v877, 16
        %v918 = vpop.permute.xlu0 %917
        %v919 = vsel %vm461, %v918, %v877
        %920 = vrot.lane.b32.xlu0 %v916, 16
        %v921 = vpop.permute.xlu0 %920
        %922 = vrot.lane.b32.xlu0 %v919, 16
        %v923 = vpop.permute.xlu0 %922
        %v924 = vsel %vm461, %v921, %v876
        %v925 = vsel %vm461, %v923, %v877
        %v926 = vmul.f32 %v924, %v664
        %v927 = vmul.f32 %v925, %v664
        %v928 = vmul.f32 %v924, %v648
        %v929 = vmul.f32 %v925, %v648
        %932 = vrot.lane.b32.xlu0 %v928, 114
        %v933 = vpop.permute.xlu0 %932
        %934 = vrot.lane.b32.xlu0 %v929, 114
        %v935 = vpop.permute.xlu0 %934
        %v938 = vsub.f32 %v926, %v933
        %v939 = vsub.f32 %v927, %v935
        %942 = vrot.lane.b32.xlu0 %v912, 113
        %v943 = vpop.permute.xlu0 %942
        %944 = vrot.lane.b32.xlu0 %v913, 113
        %v945 = vpop.permute.xlu0 %944
        %v948 = vrot.slane %v943, 7
        %v949 = vrot.slane %v945, 7
        %v950 = vsel %vm619, %v948, %v949
        %v951 = vsel %vm619, %v949, %v948
        %v952 = vmul.f32 %v951, %v356
        %v953 = vmul.f32 %v950, %v357
        %v954 = vrot.slane %v943, 1
        %v955 = vrot.slane %v945, 1
        %v956 = vsel %vm436, %v954, %v955
        %v957 = vsel %vm436, %v955, %v954
        %v958 = vmul.f32 %v956, %v350
        %v959 = vmul.f32 %v957, %v351
        %v960 = vsub.f32 %v952, %v958
        %v961 = vsub.f32 %v953, %v959
        %v962 = vand.u32 2147483647, %v938
        %v963 = vand.u32 2147483647, %v939
        %v964 = vand.u32 2147483647, %v960
        %v965 = vand.u32 2147483647, %v961
        %968 = vrot.lane.b32.xlu0 %v964, 1
        %v969 = vpop.permute.xlu0 %968
        %970 = vrot.lane.b32.xlu0 %v965, 1
        %v971 = vpop.permute.xlu0 %970
        %v974 = vadd.f32 %v962, %v969
        %v975 = vadd.f32 %v963, %v971
        %v976 = vsub.f32 %v974, %v858
        %v977 = vsub.f32 %v975, %v859
        %v978 = vand.u32 2147483647, %v976
        %v979 = vand.u32 2147483647, %v977
        %v980 = vadd.f32 %v978, 0.0
        %v981 = vadd.f32 %v979, 0.0
        %vm982 = vcmask 138248
        %v983 = vsel %vm982, %v980, 0.0
        %v984 = vsel %vm982, %v981, 0.0
        %v985 = vadd.f32 %v983, %v984
        %v986 = vrot.slane %v985, 4
        %v987 = vadd.f32 %v985, %v986
        %v988 = vrot.slane %v987, 2
        %v989 = vadd.f32 %v987, %v988
        %v990 = vrot.slane %v989, 1
        %v991 = vadd.f32 %v989, %v990
        %vm992 = vcmask 122880
        %993 = vst.msk [vmem:[%s340] sm:$0x1] %vm992, %v427
        %994 = vst.msk [vmem:[%s340 + $0x1] sm:$0x1] %vm992, %v612
        %996 = vrot.lane.b32.xlu0 %v991, 127
        %v997 = vpop.permute.xlu0 %996
        %999 = vst.msk [vmem:[%s340 + $0x2] sm:$0x1] %vm992, %v997
        %p1000 = scmp.lt.s32.totalorder %s24, 1
        %s1001 = scalar_select %p1000, %s24, 1
        %s1002 = smul.addr %s1001, 4
        %s1003 = scalar_lea.vmem %s4, %s1002
        // Predicated region
        $region53: #{tpu_custom_call.1} parent=35 // pred_check
          %p1004 = pneg %p146
        $region54: #{tpu_custom_call.1} parent=35 // pred_check_branch
          %1006 = sbr.rel (%p1004) target = $region56
        $region55: #{tpu_custom_call.1} parent=35 // pred_region
          _
        $region56: #{tpu_custom_call.1} parent=35 // pred_fallthru
          _
      $region36: #{tpu_custom_call.1} parent=5 // pred_fallthru
        _
      %p1007 = scmp.le.s32.totalorder 2, %s19
      // Predicated region
      $region57: #{tpu_custom_call.1} parent=5 // pred_check
        %p1008 = pneg %p1007
      $region58: #{tpu_custom_call.1} parent=5 // pred_check_branch
        %1010 = sbr.rel (%p1008) target = $region60
      $region59: #{tpu_custom_call.1} parent=5 // pred_region
        %s1011 = ssub.s32 %s19, 2
        // Predicated region
        $region61: #{tpu_custom_call.1} parent=59 // pred_check
          %p1012 = pneg %p152
        $region62: #{tpu_custom_call.1} parent=59 // pred_check_branch
          %1014 = sbr.rel (%p1012) target = $region64
        $region63: #{tpu_custom_call.1} parent=59 // pred_region
          %p1015 = scmp.lt.s32.totalorder %s25, 1
          %s1016 = scalar_select %p1015, %s25, 1
          %s1017 = smul.addr %s1016, 4
          %s1018 = scalar_lea.vmem %s4, %s1017
        $region64: #{tpu_custom_call.1} parent=59 // pred_fallthru
          _
      $region60: #{tpu_custom_call.1} parent=5 // pred_fallthru
        _
    $region6: #{tpu_custom_call.1} parent=1 // loop_footer
      %s23 = sadd.s32 1, %s19
    $region7: #{tpu_custom_call.1} parent=1 // loop_footer_branch
      %18 = sbr.rel target = $region3
    $region8: #{tpu_custom_call.1} parent=1 // loop_exit
      _
    %1019 = vsyncpa [#allocation3], 1
    %s1020 = scalar_lea.sflag [#allocation3], 1
    %1021 = vsyncpa %s1020, 1
    %1022 = vsyncpa [#allocation5], 1
    %s1023 = scalar_lea.sflag [#allocation5], 1
    %1024 = vsyncpa %s1023, 1
    %1025 = vsyncpa [#allocation8], 1
    %s1026 = scalar_lea.sflag [#allocation8], 1
    %1027 = vsyncpa %s1026, 1

</llo_original>
